<compile_context>
chip_gen: v6e
topology: v6e:2x2x1
jax: 0.10.0
libtpu: 0.0.40
codegen_flags: <defaults>
</compile_context>

<pallas_src>
import functools

import jax
import jax.numpy as jnp
from jax.experimental import pallas as pl
from jax.experimental.pallas import tpu as pltpu


def _logreg_kernel(x_ref, w_ref, b_ref, o_ref, *, approx_reciprocal):
    """One folded row-tile of sigmoid(x @ W_blockdiag + b).

    x_ref: [TM, K*D] lane-dense activation tile (native dtype) in VMEM
    w_ref: [K*D, K]  block-diagonal weight, resident across grid steps
    b_ref: [1, 1]    f32 bias scalar in SMEM
    o_ref: [TM, K]   f32 output tile
    """
    z = jnp.dot(x_ref[...], w_ref[...], preferred_element_type=jnp.float32)
    z = z + b_ref[0, 0]
    if approx_reciprocal:
        # sigmoid(z) = 1 / (1 + exp(-z)); approx vrcp on the idle EUP slot.
        # Deliberate ~1e-3-level deviation from the exact PyTorch sigmoid.
        o_ref[...] = pl.reciprocal(1.0 + jnp.exp(-z), approx=True).astype(o_ref.dtype)
    else:
        o_ref[...] = (1.0 / (1.0 + jnp.exp(-z))).astype(o_ref.dtype)


def _round_up(v, m):
    return ((v + m - 1) // m) * m


def _sublane_multiple(itemsize):
    # f32 -> 8 rows/vreg, bf16 -> 16, int8/fp8 -> 32
    return {4: 8, 2: 16, 1: 32}.get(itemsize, 8)


def _vmem_budget_bytes():
    # Generation-aware: ~75% of physical VMEM => ~96 MiB on v5e/v6e (128 MiB),
    # ~48 MiB on v7x (64 MiB per TC).  Fallback is the v7x-safe figure.
    try:
        cap = int(pltpu.get_tpu_info().vmem_capacity_bytes)
    except Exception:
        cap = 64 * 1024 * 1024
    return (cap * 3) // 4


def _pick_block_rows(nf, kd, k, itemsize, mult, budget):
    """Largest folded-row tile whose double-buffered x + out tiles fit `budget`.

    VMEM accounting is 128-lane-padding aware: a [tm, kd] tile occupies
    tm * round_up(kd, 128) * itemsize bytes and the f32 [tm, k] output tile
    occupies tm * round_up(k, 128) * 4 bytes, each double-buffered.
    """
    row_x = _round_up(kd, 128) * itemsize
    row_o = _round_up(k, 128) * 4
    per_row = 2 * (row_x + row_o)               # double-buffered input + output
    headroom = 2 * 1024 * 1024                  # weight tile, sems, compiler scratch
    usable = max(budget - headroom, per_row * mult)
    tm = (usable // per_row // mult) * mult
    tm = max(mult, tm)
    # Keep >= ~4 grid steps when data allows (v7x megacore + pipeline overlap);
    # for small batches this shrinks the tile instead of idling a TensorCore.
    tm_split = _round_up(pl.cdiv(nf, 4), mult)
    return max(mult, min(tm, tm_split))


def logistic_regression(x, weight, bias, *, block_rows=None, approx_reciprocal=True):
    """sigmoid(x @ weight.T + bias).

    x: [N, D] (f32 or bf16 — consumed in its native dtype, no wrapper up-cast),
    weight: [1, D] (torch nn.Linear layout), bias: [1].  Returns [N, 1] f32.
    `block_rows` (optional) is a row-tile override in *original* x rows.
    """
    n, d = x.shape
    itemsize = jnp.dtype(x.dtype).itemsize
    mult = _sublane_multiple(itemsize)

    # Lane fold: for D < 128, view k consecutive rows as one lane-dense [k*D]
    # row and use a block-diagonal [k*D, k] weight so the MXU emits k logits
    # per folded row.  Pure layout plumbing: same HBM bytes, 128/ (k*D) times
    # less lane padding in VMEM and k-x denser output stores.
    k = max(1, 128 // d) if d < 128 else 1
    n_pad = _round_up(n, k)
    x_in = x if n_pad == n else jnp.pad(x, ((0, n_pad - n), (0, 0)))
    nf = n_pad // k
    kd = k * d
    x_f = x_in.reshape(nf, kd)

    # Weight: block-diagonal [k*D, k] in the activation dtype.  NOTE: when x is
    # bf16 the weight is bf16 too (tiny deliberate quantization; f32 MXU
    # accumulation is kept).  Pass f32 x to keep exact f32 weights.
    w = weight.reshape(d, 1).astype(x.dtype)
    w_t = jnp.kron(jnp.eye(k, dtype=x.dtype), w) if k > 1 else w
    # Bias: one f32 scalar in SMEM (no VMEM tile / DMA slot wasted on it).
    b = bias.reshape(1, 1).astype(jnp.float32)

    budget = _vmem_budget_bytes()
    if block_rows is None:
        tm = _pick_block_rows(nf, kd, k, itemsize, mult, budget)
    else:
        tm = max(mult, _round_up(pl.cdiv(block_rows, k), mult))
    # A block equal to the full (folded) batch is always legal; never exceed it.
    tm = min(tm, nf)

    num_tiles = pl.cdiv(nf, tm)

    cost = pl.CostEstimate(
        flops=2 * nf * kd * k,
        transcendentals=nf * k,
        bytes_accessed=n_pad * d * itemsize + n_pad * 4 + kd * k * itemsize,
    )

    out_f = pl.pallas_call(
        functools.partial(_logreg_kernel, approx_reciprocal=approx_reciprocal),
        out_shape=jax.ShapeDtypeStruct((nf, k), jnp.float32),
        grid_spec=pltpu.PrefetchScalarGridSpec(
            num_scalar_prefetch=0,
            grid=(num_tiles,),
            in_specs=[
                # x: tiled over folded rows; BlockSpec double-buffers the DMA so
                # tile i+1 is prefetched while tile i computes.
                pl.BlockSpec((tm, kd), lambda i: (i, 0)),
                # weight: constant block index -> stays resident in VMEM.
                pl.BlockSpec((kd, k), lambda i: (0, 0)),
                # bias: scalar in SMEM.
                pl.BlockSpec(memory_space=pltpu.MemorySpace.SMEM),
            ],
            out_specs=pl.BlockSpec((tm, k), lambda i: (i, 0)),
        ),
        compiler_params=pltpu.CompilerParams(
            # Row tiles are independent -> shard the grid across both
            # TensorCores on v7x; neutral on v5e/v6e.
            dimension_semantics=("parallel",),
            vmem_limit_bytes=int(budget),
        ),
        cost_estimate=cost,
    )(x_f, w_t, b)

    out = out_f.reshape(n_pad, 1)
    return out[:n] if n_pad != n else out


if __name__ == "__main__":
    key = jax.random.PRNGKey(0)
    k_x, k_w, k_b, k_x2, k_w3, k_b3, k_x3 = jax.random.split(key, 7)

    # --- Test 1: small f32 batch, auto tiling (single tile, matches torch) ---
    input_dim = 32
    limit = 1.0 / jnp.sqrt(jnp.float32(input_dim))
    weight = jax.random.uniform(k_w, (1, input_dim), minval=-limit, maxval=limit,
                                dtype=jnp.float32)
    bias = jax.random.uniform(k_b, (1,), minval=-limit, maxval=limit,
                              dtype=jnp.float32)

    x1 = jax.random.normal(k_x, (8, input_dim), dtype=jnp.float32)
    out1 = logistic_regression(x1, weight, bias)
    jax.block_until_ready(out1)
    ref1 = jax.nn.sigmoid(x1 @ weight.T + bias)
    assert out1.shape == (8, 1)
    # approx reciprocal on the sigmoid denominator -> allow a few e-3 abs error
    assert float(jnp.max(jnp.abs(out1 - ref1))) < 5e-3

    # --- Test 2: multi-tile grid, ragged tail, bf16 activations (no up-cast) ---
    n2 = 300
    x2 = jax.random.normal(k_x2, (n2, input_dim), dtype=jnp.float32).astype(jnp.bfloat16)
    out2 = logistic_regression(x2, weight, bias, block_rows=128)
    jax.block_until_ready(out2)
    ref2 = jax.nn.sigmoid(x2.astype(jnp.float32) @ weight.T + bias)
    assert out2.shape == (n2, 1)
    assert float(jnp.max(jnp.abs(out2 - ref2))) < 2e-2

    # --- Test 3: D not dividing 128, N needing fold padding, exact sigmoid ---
    d3, n3 = 48, 257
    limit3 = 1.0 / jnp.sqrt(jnp.float32(d3))
    w3 = jax.random.uniform(k_w3, (1, d3), minval=-limit3, maxval=limit3,
                            dtype=jnp.float32)
    b3 = jax.random.uniform(k_b3, (1,), minval=-limit3, maxval=limit3,
                            dtype=jnp.float32)
    x3 = jax.random.normal(k_x3, (n3, d3), dtype=jnp.float32)
    out3 = logistic_regression(x3, w3, b3, approx_reciprocal=False)
    jax.block_until_ready(out3)
    ref3 = jax.nn.sigmoid(x3 @ w3.T + b3)
    assert out3.shape == (n3, 1)
    assert float(jnp.max(jnp.abs(out3 - ref3))) < 1e-5

    print("KERNEL_OK")
</pallas_src>

<mosaic_0001>
module attributes {stable_mosaic.version = 11 : i64} {
  func.func @_logreg_kernel(%arg0: i32, %arg1: memref<2x128xf32, #tpu.memory_space<vmem>>, %arg2: memref<128x4xf32, #tpu.memory_space<vmem>>, %arg3: memref<1x1xf32, #tpu.memory_space<smem>>, %arg4: memref<2x4xf32, #tpu.memory_space<vmem>>) attributes {dimension_semantics = [#tpu.dimension_semantics<parallel>], iteration_bounds = array<i64: 1>, scalar_prefetch = 0 : i64, scratch_operands = 0 : i64, tpu.core_type = #tpu.core_type<tc>, window_params = [{transform_indices = @transform_0, window_bounds = array<i64: 2, 128>}, {pipeline_mode = #tpu.pipeline_mode<synchronous>, transform_indices = @transform_1, window_bounds = array<i64: 128, 4>}, {transform_indices = @transform_2, window_bounds = array<i64: 1, 1>}, {transform_indices = @transform_3, window_bounds = array<i64: 2, 4>}]} {
    %c0 = arith.constant 0 : index
    %c0_0 = arith.constant 0 : index
    %0 = vector.load %arg1[%c0, %c0_0] : memref<2x128xf32, #tpu.memory_space<vmem>>, vector<2x128xf32>
    %c0_1 = arith.constant 0 : index
    %c0_2 = arith.constant 0 : index
    %1 = vector.load %arg2[%c0_1, %c0_2] : memref<128x4xf32, #tpu.memory_space<vmem>>, vector<128x4xf32>
    %cst = arith.constant dense<0.000000e+00> : vector<2x4xf32>
    %2 = tpu.matmul %0, %1, %cst {dimension_numbers = #tpu.dot_dimension_numbers<[1], [0], [0], [1], [0, 0, 1, 1], [], []>} : vector<2x128xf32>, vector<128x4xf32>, vector<2x4xf32> -> vector<2x4xf32>
    %c0_3 = arith.constant 0 : index
    %c0_4 = arith.constant 0 : index
    %3 = memref.load %arg3[%c0_3, %c0_4] : memref<1x1xf32, #tpu.memory_space<smem>>
    %4 = vector.broadcast %3 : f32 to vector<2x4xf32>
    %5 = arith.addf %2, %4 : vector<2x4xf32>
    %cst_5 = arith.constant 0.000000e+00 : f32
    %6 = vector.broadcast %cst_5 : f32 to vector<2x4xf32>
    %7 = arith.subf %6, %5 : vector<2x4xf32>
    %8 = math.exp %7 : vector<2x4xf32>
    %cst_6 = arith.constant 1.000000e+00 : f32
    %9 = vector.broadcast %cst_6 : f32 to vector<2x4xf32>
    %10 = arith.addf %9, %8 : vector<2x4xf32>
    %11 = tpu.reciprocal %10 {approx = true} : vector<2x4xf32> -> vector<2x4xf32>
    %c0_7 = arith.constant 0 : index
    %c0_8 = arith.constant 0 : index
    %12 = vector.load %arg4[%c0_7, %c0_8] : memref<2x4xf32, #tpu.memory_space<vmem>>, vector<2x4xf32>
    tpu.vector_store %arg4[%c0_7, %c0_8], %11 {strides = array<i32>} : memref<2x4xf32, #tpu.memory_space<vmem>>, vector<2x4xf32>,
    return
  }
  func.func @transform_0(%arg0: i32) -> (i32, i32) {
    %c0_i32 = arith.constant 0 : i32
    %c0_i32_0 = arith.constant 0 : i32
    return %arg0, %c0_i32 : i32, i32
  }
  func.func @transform_1(%arg0: i32) -> (i32, i32) {
    %c0_i32 = arith.constant 0 : i32
    %c0_i32_0 = arith.constant 0 : i32
    %c0_i32_1 = arith.constant 0 : i32
    return %c0_i32, %c0_i32_0 : i32, i32
  }
  func.func @transform_2(%arg0: i32) -> (i32, i32) {
    %c0_i32 = arith.constant 0 : i32
    %c0_i32_0 = arith.constant 0 : i32
    %c0_i32_1 = arith.constant 0 : i32
    return %c0_i32, %c0_i32_0 : i32, i32
  }
  func.func @transform_3(%arg0: i32) -> (i32, i32) {
    %c0_i32 = arith.constant 0 : i32
    %c0_i32_0 = arith.constant 0 : i32
    return %arg0, %c0_i32 : i32, i32
  }
}

</mosaic_0001>

<llo_original>
// kernel: tpu_custom_call.1
$region0: #{tpu_custom_call.1}
  #allocation0 [shape = 'u32[]', space=smem, size = 0x4, offset = 0x4, fixed_abs, tag = 'smem constant byte address 0x4 - core index']
  #allocation1 [shape = 'u32[144,128]{1,0:T(1,128)}', space=vmem, size = 0x12000, scoped, tag = 'internal scratch']
  #allocation2 [shape = 'f32[1,1]{1,0:T(1,128)S(6)}', space=smem, size = 0x200, scoped, tag = 'scoped memory for tpu_custom_call.1']
  %s0 = inlined_call_operand.vmem [shape: f32[2,128], index: 0, kind: input, shape index: {}]
  %s1 = inlined_call_operand.vmem [shape: f32[128,4], index: 1, kind: input, shape index: {}]
  %s2 = inlined_call_operand.<no memory space> [shape: f32[1,1], index: 2, kind: input, shape index: {}]
  %s3 = inlined_call_operand.hbm [shape: f32[2,4], index: 3, kind: output, shape index: {}]
  %s4 = sld [smem:[#allocation0]]
  $region22: #{tpu_custom_call.1} parent=0
    _
  %s6 = ssub.s32 1, %s4
  %s7 = scalar_select 0, %s6, %s4
  %8 = sst [smem:[#allocation2]] %s2
  $region1: #{tpu_custom_call.1} parent=0
    #allocation3 [shape = 'u8[1024]{0}', space=vmem, size = 0x400, scoped, tag = 'output window, operand 0, single buffered']
    #allocation4 [shape = 's32[1]{0}', space=sflag, size = 0x4, scoped, tag = 'scoped memory for tpu_custom_call.1']
    %9 = vsyncpa [#allocation4], 0
    // Predicated region
    $region2: #{tpu_custom_call.1} parent=1 // pred_check
      _
    $region3: #{tpu_custom_call.1} parent=1 // pred_check_branch
      %11 = sbr.rel (0) target = $region5
    $region4: #{tpu_custom_call.1} parent=1 // pred_region
      _
    $region5: #{tpu_custom_call.1} parent=1 // pred_fallthru
      _
    // Predicated region
    $region6: #{tpu_custom_call.1} parent=1 // pred_check
      _
    $region7: #{tpu_custom_call.1} parent=1 // pred_check_branch
      %13 = sbr.rel (0) target = $region9
    $region8: #{tpu_custom_call.1} parent=1 // pred_region
      _
    $region9: #{tpu_custom_call.1} parent=1 // pred_fallthru
      _
    // Predicated region
    $region10: #{tpu_custom_call.1} parent=1 // pred_check
      _
    $region11: #{tpu_custom_call.1} parent=1 // pred_check_branch
      %15 = sbr.rel (0) target = $region13
    $region12: #{tpu_custom_call.1} parent=1 // pred_region
      _
    $region13: #{tpu_custom_call.1} parent=1 // pred_fallthru
      _
    %v16 = vld [vmem:[%s0] sm:$0x3]
    %v17 = vld [vmem:[%s1] sm:$0xff]
    %v18 = vld [vmem:[%s1 + $0x8] sm:$0xff]
    %v19 = vld [vmem:[%s1 + $0x10] sm:$0xff]
    %v20 = vld [vmem:[%s1 + $0x18] sm:$0xff]
    %v21 = vld [vmem:[%s1 + $0x20] sm:$0xff]
    %v22 = vld [vmem:[%s1 + $0x28] sm:$0xff]
    %v23 = vld [vmem:[%s1 + $0x30] sm:$0xff]
    %v24 = vld [vmem:[%s1 + $0x38] sm:$0xff]
    %v25 = vld [vmem:[%s1 + $0x40] sm:$0xff]
    %v26 = vld [vmem:[%s1 + $0x48] sm:$0xff]
    %v27 = vld [vmem:[%s1 + $0x50] sm:$0xff]
    %v28 = vld [vmem:[%s1 + $0x58] sm:$0xff]
    %v29 = vld [vmem:[%s1 + $0x60] sm:$0xff]
    %v30 = vld [vmem:[%s1 + $0x68] sm:$0xff]
    %v31 = vld [vmem:[%s1 + $0x70] sm:$0xff]
    %v32 = vld [vmem:[%s1 + $0x78] sm:$0xff]
    %s33 = sld [smem:[#allocation2]]
    %v34 = vstv %s33
    %35 = vmatprep.subr.mxu0 0.0
    %36 = vmatpush1.msra.mxu0 %v32
    %37 = vmatprep.subr.mxu0 0.0
    %38 = vmatpush1.msra.mxu0 %v31
    %39 = vmatprep.subr.mxu0 0.0
    %40 = vmatpush1.msra.mxu0 %v30
    %41 = vmatprep.subr.mxu0 0.0
    %42 = vmatpush1.msra.mxu0 %v29
    %43 = vmatprep.subr.mxu0 0.0
    %44 = vmatpush1.msra.mxu0 %v28
    %45 = vmatprep.subr.mxu0 0.0
    %46 = vmatpush1.msra.mxu0 %v27
    %47 = vmatprep.subr.mxu0 0.0
    %48 = vmatpush1.msra.mxu0 %v26
    %49 = vmatprep.subr.mxu0 0.0
    %50 = vmatpush1.msra.mxu0 %v25
    %51 = vmatprep.subr.mxu0 0.0
    %52 = vmatpush1.msra.mxu0 %v24
    %53 = vmatprep.subr.mxu0 0.0
    %54 = vmatpush1.msra.mxu0 %v23
    %55 = vmatprep.subr.mxu0 0.0
    %56 = vmatpush1.msra.mxu0 %v22
    %57 = vmatprep.subr.mxu0 0.0
    %58 = vmatpush1.msra.mxu0 %v21
    %59 = vmatprep.subr.mxu0 0.0
    %60 = vmatpush1.msra.mxu0 %v20
    %61 = vmatprep.subr.mxu0 0.0
    %62 = vmatpush1.msra.mxu0 %v19
    %63 = vmatprep.subr.mxu0 0.0
    %64 = vmatpush1.msra.mxu0 %v18
    %65 = vmatprep.subr.mxu0 0.0
    %66 = vmatpush1.msra.mxu0 %v17
    %67 = vmatprep.subr.mxu0 0.0
    %68 = vmatpush2.msra.mxu0 0.0
    %69 = vmatprep.subr.mxu0 0.0
    %70 = vmatpush2.msra.mxu0 0.0
    %71 = vmatprep.subr.mxu0 0.0
    %72 = vmatpush2.msra.mxu0 0.0
    %73 = vmatprep.subr.mxu0 0.0
    %74 = vmatpush2.msra.mxu0 0.0
    %75 = vmatprep.subr.mxu0 0.0
    %76 = vmatpush2.msra.mxu0 0.0
    %77 = vmatprep.subr.mxu0 0.0
    %78 = vmatpush2.msra.mxu0 0.0
    %79 = vmatprep.subr.mxu0 0.0
    %80 = vmatpush2.msra.mxu0 0.0
    %81 = vmatprep.subr.mxu0 0.0
    %82 = vmatpush2.msra.mxu0 0.0
    %83 = vmatprep.subr.mxu0 0.0
    %84 = vmatpush2.msra.mxu0 0.0
    %85 = vmatprep.subr.mxu0 0.0
    %86 = vmatpush2.msra.mxu0 0.0
    %87 = vmatprep.subr.mxu0 0.0
    %88 = vmatpush2.msra.mxu0 0.0
    %89 = vmatprep.subr.mxu0 0.0
    %90 = vmatpush2.msra.mxu0 0.0
    %91 = vmatprep.subr.mxu0 0.0
    %92 = vmatpush2.msra.mxu0 0.0
    %93 = vmatprep.subr.mxu0 0.0
    %94 = vmatpush2.msra.mxu0 0.0
    %95 = vmatprep.subr.mxu0 0.0
    %96 = vmatpush2.msra.mxu0 0.0
    %97 = vmatprep.subr.mxu0 0.0
    %98 = vmatpush2.msra.mxu0 0.0
    %99 = vmatprep.mubr.f32.mxu0 0.0
    %100 = vmatmul.mubr.f32.gmra.mxu0 %v16
    %v101 = vpop.f32.mrf.mxu0
    %v102 = vadd.f32 %v34, %v101
    %v103 = vpop.f32.mrf.mxu0
    %104 = vdwg.mxu0
    %v105 = vsub.f32 0.0, %v102
    %v106 = vmul.f32 %v105, 1.442695
    %v107 = vpow.pop %v106
    %v108 = vadd.f32 %v107, 1.0
    %v109 = vrcp.pop %v108
    %vm110 = vcmask 25600
    %111 = vst.msk [vmem:[#allocation3] sm:$0x3] %vm110, %v109
    // Predicated region
    $region14: #{tpu_custom_call.1} parent=1 // pred_check
      _
    $region15: #{tpu_custom_call.1} parent=1 // pred_check_branch
      %113 = sbr.rel (0) target = $region17
    $region16: #{tpu_custom_call.1} parent=1 // pred_region
      %s115 = ssub.s32 32, 32
      %116 = vsyncadd [#allocation4], %s115
      %s118 = sshll.u32 [#allocation3], 4
      %s119 = int_to_ptr.vmem [resolvable:$true] %s118
      %121 = dma.vmem_to_hbm [thread:$0]  %s119, 32, %s3, [#allocation4]
    $region17: #{tpu_custom_call.1} parent=1 // pred_fallthru
      _
    // Predicated region
    $region18: #{tpu_custom_call.1} parent=1 // pred_check
      _
    $region19: #{tpu_custom_call.1} parent=1 // pred_check_branch
      %123 = sbr.rel (0) target = $region21
    $region20: #{tpu_custom_call.1} parent=1 // pred_region
      %124 = dma.done [#allocation4], 32
    $region21: #{tpu_custom_call.1} parent=1 // pred_fallthru
      _
    %125 = vsyncpa [#allocation4], 1

</llo_original>
